<compile_context>
chip_gen: v5e
topology: v5e:2x2
jax: 0.10.0
libtpu: 0.0.40
codegen_flags: <defaults>
</compile_context>

<pallas_src>
import functools

import jax
import jax.numpy as jnp
import numpy as np
from jax.experimental import pallas as pl
from jax.experimental.pallas import tpu as pltpu


def _round_up(x, m):
    return ((x + m - 1) // m) * m


# ---------------------------------------------------------------------------
# Kernel 1: fused weight+bias reparameterized sampling + KL divergence
# ---------------------------------------------------------------------------
def _sample_kl_kernel(mu_w_ref, rho_w_ref, eps_w_ref,
                      mu_b_ref, rho_b_ref, eps_b_ref,
                      w_ref, b_ref, kl_ref, *, prior_mu, prior_sigma):
    log_prior_sigma = float(np.log(prior_sigma + 1e-15))
    inv_2var = float(1.0 / (2.0 * prior_sigma ** 2))

    def softplus(r):
        # numerically stable softplus (no overflow for large positive rho)
        return jnp.maximum(r, 0.0) + jnp.log1p(jnp.exp(-jnp.abs(r)))

    def sample_and_kl(mu, rho, eps):
        sigma = softplus(rho)
        sample = mu + sigma * eps
        # NOTE: prior_sigma here is the module's `prior_variance` buffer, matching
        # the PyTorch reference's (sigma-vs-variance) convention exactly.
        kl = (log_prior_sigma - jnp.log(sigma + 1e-15)
              + (sigma * sigma + (mu - prior_mu) ** 2) * inv_2var - 0.5)
        return sample, jnp.sum(kl, keepdims=True)          # (1, 1)

    w, kl_w = sample_and_kl(mu_w_ref[...], rho_w_ref[...], eps_w_ref[...])
    b, kl_b = sample_and_kl(mu_b_ref[...], rho_b_ref[...], eps_b_ref[...])
    w_ref[...] = w
    b_ref[...] = b
    kl_ref[...] = kl_w + kl_b


def sample_params_and_kl(mu_w2d, rho_w2d, eps_w2d, mu_b, rho_b, eps_b,
                         prior_mu, prior_sigma):
    """Weight args: (K*K*C_out, C_in) f32.  Bias args: (C_out, 1) f32."""
    kern = functools.partial(_sample_kl_kernel,
                             prior_mu=float(prior_mu),
                             prior_sigma=float(prior_sigma))
    vmem = pl.BlockSpec(memory_space=pltpu.MemorySpace.VMEM)
    w2d, b_col, kl = pl.pallas_call(
        kern,
        out_shape=(jax.ShapeDtypeStruct(mu_w2d.shape, jnp.float32),
                   jax.ShapeDtypeStruct(mu_b.shape, jnp.float32),
                   jax.ShapeDtypeStruct((1, 1), jnp.float32)),
        in_specs=[vmem] * 6,
        out_specs=(vmem, vmem, vmem),
    )(mu_w2d, rho_w2d, eps_w2d, mu_b, rho_b, eps_b)
    return w2d, b_col, kl[0, 0]


# ---------------------------------------------------------------------------
# Kernel 2: fused conv2d (K*K accumulated shifted matmuls, no im2col in HBM)
# ---------------------------------------------------------------------------
def _conv_kernel(x_ref, w_ref, b_ref, o_ref, *, K, dil, Wp, Q):
    # x_ref: (1, C_in, Lpad)   flattened zero-padded input, one batch element
    # w_ref: (K*K, C_out, C_in) sampled weight (resident; same block every step)
    # b_ref: (C_out, 1)         sampled bias
    # o_ref: (1, C_out, Q)      lane-dense virtual output, Q % 128 == 0
    xb = x_ref[0].astype(jnp.bfloat16)                     # (C_in, Lpad), bf16 MXU feed
    acc = jnp.zeros(o_ref.shape[1:], jnp.float32)          # (C_out, Q) f32 accumulator
    for ki in range(K):
        for kj in range(K):
            off = (ki * Wp + kj) * dil                     # static shift
            w_kk = w_ref[ki * K + kj].astype(jnp.bfloat16)  # (C_out, C_in)
            acc = acc + jnp.dot(w_kk, xb[:, off:off + Q],
                                preferred_element_type=jnp.float32)
    o_ref[0] = acc + b_ref[...]                            # bias broadcast over lanes


def conv2d_pallas(xflat, w_kk, b_col, *, K, dil, Wp, Q):
    N, C_in, Lpad = xflat.shape
    KK, C_out, _ = w_kk.shape
    kern = functools.partial(_conv_kernel, K=K, dil=dil, Wp=Wp, Q=Q)
    return pl.pallas_call(
        kern,
        out_shape=jax.ShapeDtypeStruct((N, C_out, Q), jnp.float32),
        grid_spec=pltpu.PrefetchScalarGridSpec(
            num_scalar_prefetch=0,
            grid=(N,),
            in_specs=[pl.BlockSpec((1, C_in, Lpad), lambda n: (n, 0, 0)),
                      pl.BlockSpec((KK, C_out, C_in), lambda n: (0, 0, 0)),
                      pl.BlockSpec((C_out, 1), lambda n: (0, 0))],
            out_specs=pl.BlockSpec((1, C_out, Q), lambda n: (n, 0, 0)),
        ),
        compiler_params=pltpu.CompilerParams(
            dimension_semantics=("parallel",),          # N=2 -> both v7x TCs busy
            vmem_limit_bytes=32 * 1024 * 1024),         # explicit, safe on v5e/v6e/v7x
    )(xflat, w_kk, b_col)


# ---------------------------------------------------------------------------
# The variational conv2d forward
# ---------------------------------------------------------------------------
def conv2d_variational_forward(x, params, *, kernel_size, stride, padding,
                               dilation, prior_mean, prior_variance):
    assert stride == 1, "fused Pallas conv path implements stride=1 (module default)"
    C_out, C_in, K, _ = params["mu_kernel"].shape
    N, _, H, W = x.shape
    Hp, Wp = H + 2 * padding, W + 2 * padding
    Ho = (H + 2 * padding - dilation * (K - 1) - 1) // stride + 1
    Wo = (W + 2 * padding - dilation * (K - 1) - 1) // stride + 1

    # --- tiny parameter-layout transforms (a few KB) ---
    def to_w2d(a):  # (C_out, C_in, K, K) -> (K*K*C_out, C_in); row = (ki*K+kj)*C_out+co
        return a.transpose(2, 3, 0, 1).reshape(K * K * C_out, C_in)

    mu_w2d, rho_w2d, eps_w2d = [to_w2d(params[k])
                                for k in ("mu_kernel", "rho_kernel", "eps_kernel")]
    mu_b = params["mu_bias"].reshape(C_out, 1)
    rho_b = params["rho_bias"].reshape(C_out, 1)
    eps_b = params["eps_bias"].reshape(C_out, 1)

    # --- kernel 1: sample weight + bias and compute KL (single launch) ---
    w2d, b_col, kl = sample_params_and_kl(mu_w2d, rho_w2d, eps_w2d,
                                          mu_b, rho_b, eps_b,
                                          prior_mean, prior_variance)
    w_kk = w2d.reshape(K * K, C_out, C_in)                 # free (contiguous) reshape

    # --- input prep: spatial zero-pad, flatten HxW, pad flat axis for safe reads ---
    Q = _round_up(Ho * Wp, 128)                            # lane-dense virtual axis
    Lpad = _round_up(Q + (K - 1) * dilation * (Wp + 1), 128)
    xp = jnp.pad(x, ((0, 0), (0, 0), (padding, padding), (padding, padding)))
    xflat = jnp.pad(xp.reshape(N, C_in, Hp * Wp),
                    ((0, 0), (0, 0), (0, Lpad - Hp * Wp)))

    # --- kernel 2: fused conv, output already NCHW-major ---
    out_virt = conv2d_pallas(xflat, w_kk, b_col, K=K, dil=dilation, Wp=Wp, Q=Q)

    # valid outputs live at q = ho*Wp + wo; small slice of the (small) output only
    out = out_virt[:, :, :Ho * Wp].reshape(N, C_out, Ho, Wp)[:, :, :, :Wo]
    return out, kl


# ---------------------------------------------------------------------------
# Main
# ---------------------------------------------------------------------------
if __name__ == "__main__":
    prior_mean = 0.0
    prior_variance = 1.0
    posterior_rho_init = -3.0
    in_channels, out_channels = 4, 8
    kernel_size, stride, padding, dilation = 3, 1, 1, 1

    key = jax.random.PRNGKey(0)
    k_x, k_muw, k_rhow, k_mub, k_rhob, k_epsw, k_epsb = jax.random.split(key, 7)

    N, H, W = 2, 16, 16
    x = jax.random.normal(k_x, (N, in_channels, H, W), dtype=jnp.float32)

    wshape = (out_channels, in_channels, kernel_size, kernel_size)
    params = {
        "mu_kernel": 0.1 * jax.random.normal(k_muw, wshape, jnp.float32),
        "rho_kernel": posterior_rho_init
                      + 0.1 * jax.random.normal(k_rhow, wshape, jnp.float32),
        "mu_bias": 0.1 * jax.random.normal(k_mub, (out_channels,), jnp.float32),
        "rho_bias": posterior_rho_init
                    + 0.1 * jax.random.normal(k_rhob, (out_channels,), jnp.float32),
        # eps buffers are resampled ~N(0,1) each forward in the PyTorch module;
        # sampled deterministically here for reproducible verification.
        "eps_kernel": jax.random.normal(k_epsw, wshape, jnp.float32),
        "eps_bias": jax.random.normal(k_epsb, (out_channels,), jnp.float32),
    }

    out, kl = conv2d_variational_forward(
        x, params, kernel_size=kernel_size, stride=stride, padding=padding,
        dilation=dilation, prior_mean=prior_mean, prior_variance=prior_variance)
    out = jax.block_until_ready(out)
    kl = jax.block_until_ready(kl)

    # --- reference check (plain JAX/XLA, f32) ---
    def softplus(r):
        return jnp.maximum(r, 0.0) + jnp.log1p(jnp.exp(-jnp.abs(r)))

    sigma_w = softplus(params["rho_kernel"])
    weight_ref = params["mu_kernel"] + sigma_w * params["eps_kernel"]
    sigma_b = softplus(params["rho_bias"])
    bias_ref = params["mu_bias"] + sigma_b * params["eps_bias"]

    def kl_div(mu_q, sigma_q, mu_p, sigma_p):
        return jnp.sum(jnp.log(sigma_p + 1e-15) - jnp.log(sigma_q + 1e-15)
                       + (sigma_q ** 2 + (mu_q - mu_p) ** 2) / (2 * sigma_p ** 2)
                       - 0.5)

    kl_ref = (kl_div(params["mu_kernel"], sigma_w, prior_mean, prior_variance)
              + kl_div(params["mu_bias"], sigma_b, prior_mean, prior_variance))
    out_ref = jax.lax.conv_general_dilated(
        x, weight_ref, window_strides=(stride, stride),
        padding=[(padding, padding), (padding, padding)],
        rhs_dilation=(dilation, dilation),
        dimension_numbers=("NCHW", "OIHW", "NCHW"))
    out_ref = out_ref + bias_ref[None, :, None, None]

    assert out.shape == (N, out_channels, H, W)
    # Conv operands are fed to the MXU in bf16 (f32 accumulation) -> loosened tol.
    np.testing.assert_allclose(np.asarray(out), np.asarray(out_ref),
                               rtol=3e-2, atol=3e-2)
    np.testing.assert_allclose(float(kl), float(kl_ref), rtol=1e-4, atol=1e-3)

    print("KERNEL_OK")
</pallas_src>

<mosaic_0001>
module attributes {stable_mosaic.version = 11 : i64} {
  func.func @_sample_kl_kernel(%arg0: memref<72x4xf32, #tpu.memory_space<vmem>>, %arg1: memref<72x4xf32, #tpu.memory_space<vmem>>, %arg2: memref<72x4xf32, #tpu.memory_space<vmem>>, %arg3: memref<8x1xf32, #tpu.memory_space<vmem>>, %arg4: memref<8x1xf32, #tpu.memory_space<vmem>>, %arg5: memref<8x1xf32, #tpu.memory_space<vmem>>, %arg6: memref<72x4xf32, #tpu.memory_space<vmem>>, %arg7: memref<8x1xf32, #tpu.memory_space<vmem>>, %arg8: memref<1x1xf32, #tpu.memory_space<vmem>>) attributes {dimension_semantics = [], scalar_prefetch = 0 : i64, scratch_operands = 0 : i64, tpu.core_type = #tpu.core_type<tc>} {
    %c0 = arith.constant 0 : index
    %c0_0 = arith.constant 0 : index
    %0 = vector.load %arg0[%c0, %c0_0] : memref<72x4xf32, #tpu.memory_space<vmem>>, vector<72x4xf32>
    %c0_1 = arith.constant 0 : index
    %c0_2 = arith.constant 0 : index
    %1 = vector.load %arg1[%c0_1, %c0_2] : memref<72x4xf32, #tpu.memory_space<vmem>>, vector<72x4xf32>
    %c0_3 = arith.constant 0 : index
    %c0_4 = arith.constant 0 : index
    %2 = vector.load %arg2[%c0_3, %c0_4] : memref<72x4xf32, #tpu.memory_space<vmem>>, vector<72x4xf32>
    %cst = arith.constant 0.000000e+00 : f32
    %3 = vector.broadcast %cst : f32 to vector<72x4xf32>
    %4 = arith.maximumf %1, %3 : vector<72x4xf32>
    %5 = math.absf %1 : vector<72x4xf32>
    %cst_5 = arith.constant 0.000000e+00 : f32
    %6 = vector.broadcast %cst_5 : f32 to vector<72x4xf32>
    %7 = arith.subf %6, %5 : vector<72x4xf32>
    %8 = math.exp %7 : vector<72x4xf32>
    %9 = math.log1p %8 : vector<72x4xf32>
    %10 = arith.addf %4, %9 : vector<72x4xf32>
    %11 = arith.mulf %10, %2 : vector<72x4xf32>
    %12 = arith.addf %0, %11 : vector<72x4xf32>
    %cst_6 = arith.constant 1.000000e-15 : f32
    %13 = vector.broadcast %cst_6 : f32 to vector<72x4xf32>
    %14 = arith.addf %10, %13 : vector<72x4xf32>
    %15 = math.log %14 : vector<72x4xf32>
    %cst_7 = arith.constant 1.11022302E-15 : f32
    %16 = vector.broadcast %cst_7 : f32 to vector<72x4xf32>
    %17 = arith.subf %16, %15 : vector<72x4xf32>
    %18 = arith.mulf %10, %10 : vector<72x4xf32>
    %cst_8 = arith.constant 0.000000e+00 : f32
    %19 = vector.broadcast %cst_8 : f32 to vector<72x4xf32>
    %20 = arith.subf %0, %19 : vector<72x4xf32>
    %21 = arith.mulf %20, %20 : vector<72x4xf32>
    %22 = arith.addf %18, %21 : vector<72x4xf32>
    %cst_9 = arith.constant 5.000000e-01 : f32
    %23 = vector.broadcast %cst_9 : f32 to vector<72x4xf32>
    %24 = arith.mulf %22, %23 : vector<72x4xf32>
    %25 = arith.addf %17, %24 : vector<72x4xf32>
    %cst_10 = arith.constant 5.000000e-01 : f32
    %26 = vector.broadcast %cst_10 : f32 to vector<72x4xf32>
    %27 = arith.subf %25, %26 : vector<72x4xf32>
    %28 = vector.shape_cast %27 : vector<72x4xf32> to vector<1x72x4xf32>
    %cst_11 = arith.constant dense<0.000000e+00> : vector<1xf32>
    %29 = vector.multi_reduction <add>, %28, %cst_11 [1, 2] : vector<1x72x4xf32> to vector<1xf32>
    %30 = vector.shape_cast %29 : vector<1xf32> to vector<1x1x1xf32>
    %31 = vector.extract %30[0, 0, 0] : f32 from vector<1x1x1xf32>
    %32 = vector.broadcast %31 : f32 to vector<1x1xf32>
    %c0_12 = arith.constant 0 : index
    %c0_13 = arith.constant 0 : index
    %33 = vector.load %arg3[%c0_12, %c0_13] : memref<8x1xf32, #tpu.memory_space<vmem>>, vector<8x1xf32>
    %c0_14 = arith.constant 0 : index
    %c0_15 = arith.constant 0 : index
    %34 = vector.load %arg4[%c0_14, %c0_15] : memref<8x1xf32, #tpu.memory_space<vmem>>, vector<8x1xf32>
    %c0_16 = arith.constant 0 : index
    %c0_17 = arith.constant 0 : index
    %35 = vector.load %arg5[%c0_16, %c0_17] : memref<8x1xf32, #tpu.memory_space<vmem>>, vector<8x1xf32>
    %cst_18 = arith.constant 0.000000e+00 : f32
    %36 = vector.broadcast %cst_18 : f32 to vector<8x1xf32>
    %37 = arith.maximumf %34, %36 : vector<8x1xf32>
    %38 = math.absf %34 : vector<8x1xf32>
    %cst_19 = arith.constant 0.000000e+00 : f32
    %39 = vector.broadcast %cst_19 : f32 to vector<8x1xf32>
    %40 = arith.subf %39, %38 : vector<8x1xf32>
    %41 = math.exp %40 : vector<8x1xf32>
    %42 = math.log1p %41 : vector<8x1xf32>
    %43 = arith.addf %37, %42 : vector<8x1xf32>
    %44 = arith.mulf %43, %35 : vector<8x1xf32>
    %45 = arith.addf %33, %44 : vector<8x1xf32>
    %cst_20 = arith.constant 1.000000e-15 : f32
    %46 = vector.broadcast %cst_20 : f32 to vector<8x1xf32>
    %47 = arith.addf %43, %46 : vector<8x1xf32>
    %48 = math.log %47 : vector<8x1xf32>
    %cst_21 = arith.constant 1.11022302E-15 : f32
    %49 = vector.broadcast %cst_21 : f32 to vector<8x1xf32>
    %50 = arith.subf %49, %48 : vector<8x1xf32>
    %51 = arith.mulf %43, %43 : vector<8x1xf32>
    %cst_22 = arith.constant 0.000000e+00 : f32
    %52 = vector.broadcast %cst_22 : f32 to vector<8x1xf32>
    %53 = arith.subf %33, %52 : vector<8x1xf32>
    %54 = arith.mulf %53, %53 : vector<8x1xf32>
    %55 = arith.addf %51, %54 : vector<8x1xf32>
    %cst_23 = arith.constant 5.000000e-01 : f32
    %56 = vector.broadcast %cst_23 : f32 to vector<8x1xf32>
    %57 = arith.mulf %55, %56 : vector<8x1xf32>
    %58 = arith.addf %50, %57 : vector<8x1xf32>
    %cst_24 = arith.constant 5.000000e-01 : f32
    %59 = vector.broadcast %cst_24 : f32 to vector<8x1xf32>
    %60 = arith.subf %58, %59 : vector<8x1xf32>
    %61 = vector.shape_cast %60 : vector<8x1xf32> to vector<1x8x1xf32>
    %cst_25 = arith.constant dense<0.000000e+00> : vector<1xf32>
    %62 = vector.multi_reduction <add>, %61, %cst_25 [1, 2] : vector<1x8x1xf32> to vector<1xf32>
    %63 = vector.shape_cast %62 : vector<1xf32> to vector<1x1x1xf32>
    %64 = vector.extract %63[0, 0, 0] : f32 from vector<1x1x1xf32>
    %65 = vector.broadcast %64 : f32 to vector<1x1xf32>
    %c0_26 = arith.constant 0 : index
    %c0_27 = arith.constant 0 : index
    %66 = vector.load %arg6[%c0_26, %c0_27] : memref<72x4xf32, #tpu.memory_space<vmem>>, vector<72x4xf32>
    tpu.vector_store %arg6[%c0_26, %c0_27], %12 {strides = array<i32>} : memref<72x4xf32, #tpu.memory_space<vmem>>, vector<72x4xf32>,
    %c0_28 = arith.constant 0 : index
    %c0_29 = arith.constant 0 : index
    %67 = vector.load %arg7[%c0_28, %c0_29] : memref<8x1xf32, #tpu.memory_space<vmem>>, vector<8x1xf32>
    tpu.vector_store %arg7[%c0_28, %c0_29], %45 {strides = array<i32>} : memref<8x1xf32, #tpu.memory_space<vmem>>, vector<8x1xf32>,
    %68 = arith.addf %32, %65 : vector<1x1xf32>
    %c0_30 = arith.constant 0 : index
    %c0_31 = arith.constant 0 : index
    %69 = vector.load %arg8[%c0_30, %c0_31] : memref<1x1xf32, #tpu.memory_space<vmem>>, vector<1x1xf32>
    tpu.vector_store %arg8[%c0_30, %c0_31], %68 {strides = array<i32>} : memref<1x1xf32, #tpu.memory_space<vmem>>, vector<1x1xf32>,
    return
  }
}

</mosaic_0001>

<llo_original>
// kernel: tpu_custom_call.1
$region0: #{tpu_custom_call.1}
  #allocation0 [shape = 'u32[]', space=smem, size = 0x4, offset = 0x4, fixed_abs, tag = 'smem constant byte address 0x4 - core index']
  #allocation1 [shape = 'u32[72,128]{1,0:T(1,128)}', space=vmem, size = 0x9000, scoped, tag = 'internal scratch']
  %s0 = inlined_call_operand.vmem [shape: f32[72,4], index: 0, kind: input, shape index: {}]
  %s1 = inlined_call_operand.vmem [shape: f32[72,4], index: 1, kind: input, shape index: {}]
  %s2 = inlined_call_operand.vmem [shape: f32[72,4], index: 2, kind: input, shape index: {}]
  %s3 = inlined_call_operand.vmem [shape: f32[8,1], index: 3, kind: input, shape index: {}]
  %s4 = inlined_call_operand.vmem [shape: f32[8,1], index: 4, kind: input, shape index: {}]
  %s5 = inlined_call_operand.vmem [shape: f32[8,1], index: 5, kind: input, shape index: {}]
  %s6 = inlined_call_operand.vmem [shape: f32[72,4], index: 6, kind: output, shape index: {0}]
  %s7 = inlined_call_operand.vmem [shape: f32[8,1], index: 7, kind: output, shape index: {1}]
  %s8 = inlined_call_operand.hbm [shape: f32[1,1], index: 8, kind: output, shape index: {2}]
  %9 = xla_tuple %s6, %s7, %s8
  %s10 = sld [smem:[#allocation0]]
  $region50: #{tpu_custom_call.1} parent=0
    _
  %s12 = ssub.s32 1, %s10
  %s13 = scalar_select 0, %s12, %s10
  $region1: #{tpu_custom_call.1} parent=0
    #allocation2 [shape = 'u8[512]{0}', space=vmem, size = 0x400, scoped, tag = 'output window, operand 2, single buffered']
    #allocation3 [shape = 's32[1]{0}', space=sflag, size = 0x4, scoped, tag = 'scoped memory for tpu_custom_call.1']
    %14 = vsyncpa [#allocation3], 0
    // Predicated region
    $region2: #{tpu_custom_call.1} parent=1 // pred_check
      _
    $region3: #{tpu_custom_call.1} parent=1 // pred_check_branch
      %16 = sbr.rel (0) target = $region5
    $region4: #{tpu_custom_call.1} parent=1 // pred_region
      _
    $region5: #{tpu_custom_call.1} parent=1 // pred_fallthru
      _
    // Predicated region
    $region6: #{tpu_custom_call.1} parent=1 // pred_check
      _
    $region7: #{tpu_custom_call.1} parent=1 // pred_check_branch
      %18 = sbr.rel (0) target = $region9
    $region8: #{tpu_custom_call.1} parent=1 // pred_region
      _
    $region9: #{tpu_custom_call.1} parent=1 // pred_fallthru
      _
    // Predicated region
    $region10: #{tpu_custom_call.1} parent=1 // pred_check
      _
    $region11: #{tpu_custom_call.1} parent=1 // pred_check_branch
      %20 = sbr.rel (0) target = $region13
    $region12: #{tpu_custom_call.1} parent=1 // pred_region
      _
    $region13: #{tpu_custom_call.1} parent=1 // pred_fallthru
      _
    // Predicated region
    $region14: #{tpu_custom_call.1} parent=1 // pred_check
      _
    $region15: #{tpu_custom_call.1} parent=1 // pred_check_branch
      %22 = sbr.rel (0) target = $region17
    $region16: #{tpu_custom_call.1} parent=1 // pred_region
      _
    $region17: #{tpu_custom_call.1} parent=1 // pred_fallthru
      _
    // Predicated region
    $region18: #{tpu_custom_call.1} parent=1 // pred_check
      _
    $region19: #{tpu_custom_call.1} parent=1 // pred_check_branch
      %24 = sbr.rel (0) target = $region21
    $region20: #{tpu_custom_call.1} parent=1 // pred_region
      _
    $region21: #{tpu_custom_call.1} parent=1 // pred_fallthru
      _
    // Predicated region
    $region22: #{tpu_custom_call.1} parent=1 // pred_check
      _
    $region23: #{tpu_custom_call.1} parent=1 // pred_check_branch
      %26 = sbr.rel (0) target = $region25
    $region24: #{tpu_custom_call.1} parent=1 // pred_region
      _
    $region25: #{tpu_custom_call.1} parent=1 // pred_fallthru
      _
    %v27 = vld [vmem:[%s0] sm:$0xff]
    %v28 = vld [vmem:[%s0 + $0x8] sm:$0xff]
    %v29 = vld [vmem:[%s0 + $0x10] sm:$0xff]
    %v30 = vld [vmem:[%s0 + $0x18] sm:$0xff]
    %v31 = vld [vmem:[%s0 + $0x20] sm:$0xff]
    %v32 = vld [vmem:[%s0 + $0x28] sm:$0xff]
    %v33 = vld [vmem:[%s0 + $0x30] sm:$0xff]
    %v34 = vld [vmem:[%s0 + $0x38] sm:$0xff]
    %v35 = vld [vmem:[%s0 + $0x40] sm:$0xff]
    %v36 = vld [vmem:[%s1] sm:$0xff]
    %v37 = vld [vmem:[%s1 + $0x8] sm:$0xff]
    %v38 = vld [vmem:[%s1 + $0x10] sm:$0xff]
    %v39 = vld [vmem:[%s1 + $0x18] sm:$0xff]
    %v40 = vld [vmem:[%s1 + $0x20] sm:$0xff]
    %v41 = vld [vmem:[%s1 + $0x28] sm:$0xff]
    %v42 = vld [vmem:[%s1 + $0x30] sm:$0xff]
    %v43 = vld [vmem:[%s1 + $0x38] sm:$0xff]
    %v44 = vld [vmem:[%s1 + $0x40] sm:$0xff]
    %v45 = vld [vmem:[%s2] sm:$0xff]
    %v46 = vld [vmem:[%s2 + $0x8] sm:$0xff]
    %v47 = vld [vmem:[%s2 + $0x10] sm:$0xff]
    %v48 = vld [vmem:[%s2 + $0x18] sm:$0xff]
    %v49 = vld [vmem:[%s2 + $0x20] sm:$0xff]
    %v50 = vld [vmem:[%s2 + $0x28] sm:$0xff]
    %v51 = vld [vmem:[%s2 + $0x30] sm:$0xff]
    %v52 = vld [vmem:[%s2 + $0x38] sm:$0xff]
    %v53 = vld [vmem:[%s2 + $0x40] sm:$0xff]
    %v54 = vmax.f32 %v36, 0.0
    %v55 = vmax.f32 %v37, 0.0
    %v56 = vmax.f32 %v38, 0.0
    %v57 = vmax.f32 %v39, 0.0
    %v58 = vmax.f32 %v40, 0.0
    %v59 = vmax.f32 %v41, 0.0
    %v60 = vmax.f32 %v42, 0.0
    %v61 = vmax.f32 %v43, 0.0
    %v62 = vmax.f32 %v44, 0.0
    %v63 = vand.u32 2147483647, %v36
    %v64 = vand.u32 2147483647, %v37
    %v65 = vand.u32 2147483647, %v38
    %v66 = vand.u32 2147483647, %v39
    %v67 = vand.u32 2147483647, %v40
    %v68 = vand.u32 2147483647, %v41
    %v69 = vand.u32 2147483647, %v42
    %v70 = vand.u32 2147483647, %v43
    %v71 = vand.u32 2147483647, %v44
    %v72 = vsub.f32 0.0, %v63
    %v73 = vsub.f32 0.0, %v64
    %v74 = vsub.f32 0.0, %v65
    %v75 = vsub.f32 0.0, %v66
    %v76 = vsub.f32 0.0, %v67
    %v77 = vsub.f32 0.0, %v68
    %v78 = vsub.f32 0.0, %v69
    %v79 = vsub.f32 0.0, %v70
    %v80 = vsub.f32 0.0, %v71
    %v81 = vmul.f32 %v72, 1.442695
    %v82 = vpow.pop %v81
    %v83 = vmul.f32 %v73, 1.442695
    %v84 = vpow.pop %v83
    %v85 = vmul.f32 %v74, 1.442695
    %v86 = vpow.pop %v85
    %v87 = vmul.f32 %v75, 1.442695
    %v88 = vpow.pop %v87
    %v89 = vmul.f32 %v76, 1.442695
    %v90 = vpow.pop %v89
    %v91 = vmul.f32 %v77, 1.442695
    %v92 = vpow.pop %v91
    %v93 = vmul.f32 %v78, 1.442695
    %v94 = vpow.pop %v93
    %v95 = vmul.f32 %v79, 1.442695
    %v96 = vpow.pop %v95
    %v97 = vmul.f32 %v80, 1.442695
    %v98 = vpow.pop %v97
    %v99 = vadd.f32 %v82, 1.0
    %v100 = vlog2.pop %v99
    %v101 = vmul.f32 %v100, 0.6931472
    %v102 = vmul.f32 -0.5, %v82
    %v103 = vadd.f32 %v102, 1.0
    %v104 = vmul.f32 %v103, %v82
    %v105 = vand.u32 2147483647, %v82
    %vm106 = vcmp.lt.f32.partialorder %v105, 0.0004427343
    %v107 = vsel %vm106, %v104, %v101
    %v108 = vadd.f32 %v84, 1.0
    %v109 = vlog2.pop %v108
    %v110 = vmul.f32 %v109, 0.6931472
    %v111 = vmul.f32 -0.5, %v84
    %v112 = vadd.f32 %v111, 1.0
    %v113 = vmul.f32 %v112, %v84
    %v114 = vand.u32 2147483647, %v84
    %vm115 = vcmp.lt.f32.partialorder %v114, 0.0004427343
    %v116 = vsel %vm115, %v113, %v110
    %v117 = vadd.f32 %v86, 1.0
    %v118 = vlog2.pop %v117
    %v119 = vmul.f32 %v118, 0.6931472
    %v120 = vmul.f32 -0.5, %v86
    %v121 = vadd.f32 %v120, 1.0
    %v122 = vmul.f32 %v121, %v86
    %v123 = vand.u32 2147483647, %v86
    %vm124 = vcmp.lt.f32.partialorder %v123, 0.0004427343
    %v125 = vsel %vm124, %v122, %v119
    %v126 = vadd.f32 %v88, 1.0
    %v127 = vlog2.pop %v126
    %v128 = vmul.f32 %v127, 0.6931472
    %v129 = vmul.f32 -0.5, %v88
    %v130 = vadd.f32 %v129, 1.0
    %v131 = vmul.f32 %v130, %v88
    %v132 = vand.u32 2147483647, %v88
    %vm133 = vcmp.lt.f32.partialorder %v132, 0.0004427343
    %v134 = vsel %vm133, %v131, %v128
    %v135 = vadd.f32 %v90, 1.0
    %v136 = vlog2.pop %v135
    %v137 = vmul.f32 %v136, 0.6931472
    %v138 = vmul.f32 -0.5, %v90
    %v139 = vadd.f32 %v138, 1.0
    %v140 = vmul.f32 %v139, %v90
    %v141 = vand.u32 2147483647, %v90
    %vm142 = vcmp.lt.f32.partialorder %v141, 0.0004427343
    %v143 = vsel %vm142, %v140, %v137
    %v144 = vadd.f32 %v92, 1.0
    %v145 = vlog2.pop %v144
    %v146 = vmul.f32 %v145, 0.6931472
    %v147 = vmul.f32 -0.5, %v92
    %v148 = vadd.f32 %v147, 1.0
    %v149 = vmul.f32 %v148, %v92
    %v150 = vand.u32 2147483647, %v92
    %vm151 = vcmp.lt.f32.partialorder %v150, 0.0004427343
    %v152 = vsel %vm151, %v149, %v146
    %v153 = vadd.f32 %v94, 1.0
    %v154 = vlog2.pop %v153
    %v155 = vmul.f32 %v154, 0.6931472
    %v156 = vmul.f32 -0.5, %v94
    %v157 = vadd.f32 %v156, 1.0
    %v158 = vmul.f32 %v157, %v94
    %v159 = vand.u32 2147483647, %v94
    %vm160 = vcmp.lt.f32.partialorder %v159, 0.0004427343
    %v161 = vsel %vm160, %v158, %v155
    %v162 = vadd.f32 %v96, 1.0
    %v163 = vlog2.pop %v162
    %v164 = vmul.f32 %v163, 0.6931472
    %v165 = vmul.f32 -0.5, %v96
    %v166 = vadd.f32 %v165, 1.0
    %v167 = vmul.f32 %v166, %v96
    %v168 = vand.u32 2147483647, %v96
    %vm169 = vcmp.lt.f32.partialorder %v168, 0.0004427343
    %v170 = vsel %vm169, %v167, %v164
    %v171 = vadd.f32 %v98, 1.0
    %v172 = vlog2.pop %v171
    %v173 = vmul.f32 %v172, 0.6931472
    %v174 = vmul.f32 -0.5, %v98
    %v175 = vadd.f32 %v174, 1.0
    %v176 = vmul.f32 %v175, %v98
    %v177 = vand.u32 2147483647, %v98
    %vm178 = vcmp.lt.f32.partialorder %v177, 0.0004427343
    %v179 = vsel %vm178, %v176, %v173
    %v180 = vadd.f32 %v54, %v107
    %v181 = vadd.f32 %v55, %v116
    %v182 = vadd.f32 %v56, %v125
    %v183 = vadd.f32 %v57, %v134
    %v184 = vadd.f32 %v58, %v143
    %v185 = vadd.f32 %v59, %v152
    %v186 = vadd.f32 %v60, %v161
    %v187 = vadd.f32 %v61, %v170
    %v188 = vadd.f32 %v62, %v179
    %v189 = vmul.f32 %v180, %v45
    %v190 = vmul.f32 %v181, %v46
    %v191 = vmul.f32 %v182, %v47
    %v192 = vmul.f32 %v183, %v48
    %v193 = vmul.f32 %v184, %v49
    %v194 = vmul.f32 %v185, %v50
    %v195 = vmul.f32 %v186, %v51
    %v196 = vmul.f32 %v187, %v52
    %v197 = vmul.f32 %v188, %v53
    %v198 = vadd.f32 %v27, %v189
    %v199 = vadd.f32 %v28, %v190
    %v200 = vadd.f32 %v29, %v191
    %v201 = vadd.f32 %v30, %v192
    %v202 = vadd.f32 %v31, %v193
    %v203 = vadd.f32 %v32, %v194
    %v204 = vadd.f32 %v33, %v195
    %v205 = vadd.f32 %v34, %v196
    %v206 = vadd.f32 %v35, %v197
    %v207 = vadd.f32 %v180, 1e-15
    %v208 = vadd.f32 %v181, 1e-15
    %v209 = vadd.f32 %v182, 1e-15
    %v210 = vadd.f32 %v183, 1e-15
    %v211 = vadd.f32 %v184, 1e-15
    %v212 = vadd.f32 %v185, 1e-15
    %v213 = vadd.f32 %v186, 1e-15
    %v214 = vadd.f32 %v187, 1e-15
    %v215 = vadd.f32 %v188, 1e-15
    %v216 = vlog2.pop %v207
    %v217 = vmul.f32 %v216, 0.6931472
    %v218 = vlog2.pop %v208
    %v219 = vmul.f32 %v218, 0.6931472
    %v220 = vlog2.pop %v209
    %v221 = vmul.f32 %v220, 0.6931472
    %v222 = vlog2.pop %v210
    %v223 = vmul.f32 %v222, 0.6931472
    %v224 = vlog2.pop %v211
    %v225 = vmul.f32 %v224, 0.6931472
    %v226 = vlog2.pop %v212
    %v227 = vmul.f32 %v226, 0.6931472
    %v228 = vlog2.pop %v213
    %v229 = vmul.f32 %v228, 0.6931472
    %v230 = vlog2.pop %v214
    %v231 = vmul.f32 %v230, 0.6931472
    %v232 = vlog2.pop %v215
    %v233 = vmul.f32 %v232, 0.6931472
    %v234 = vsub.f32 1.110223e-15, %v217
    %v235 = vsub.f32 1.110223e-15, %v219
    %v236 = vsub.f32 1.110223e-15, %v221
    %v237 = vsub.f32 1.110223e-15, %v223
    %v238 = vsub.f32 1.110223e-15, %v225
    %v239 = vsub.f32 1.110223e-15, %v227
    %v240 = vsub.f32 1.110223e-15, %v229
    %v241 = vsub.f32 1.110223e-15, %v231
    %v242 = vsub.f32 1.110223e-15, %v233
    %v243 = vmul.f32 %v180, %v180
    %v244 = vmul.f32 %v181, %v181
    %v245 = vmul.f32 %v182, %v182
    %v246 = vmul.f32 %v183, %v183
    %v247 = vmul.f32 %v184, %v184
    %v248 = vmul.f32 %v185, %v185
    %v249 = vmul.f32 %v186, %v186
    %v250 = vmul.f32 %v187, %v187
    %v251 = vmul.f32 %v188, %v188
    %v252 = vmul.f32 %v27, %v27
    %v253 = vmul.f32 %v28, %v28
    %v254 = vmul.f32 %v29, %v29
    %v255 = vmul.f32 %v30, %v30
    %v256 = vmul.f32 %v31, %v31
    %v257 = vmul.f32 %v32, %v32
    %v258 = vmul.f32 %v33, %v33
    %v259 = vmul.f32 %v34, %v34
    %v260 = vmul.f32 %v35, %v35
    %v261 = vadd.f32 %v243, %v252
    %v262 = vadd.f32 %v244, %v253
    %v263 = vadd.f32 %v245, %v254
    %v264 = vadd.f32 %v246, %v255
    %v265 = vadd.f32 %v247, %v256
    %v266 = vadd.f32 %v248, %v257
    %v267 = vadd.f32 %v249, %v258
    %v268 = vadd.f32 %v250, %v259
    %v269 = vadd.f32 %v251, %v260
    %v270 = vmul.f32 %v261, 0.5
    %v271 = vmul.f32 %v262, 0.5
    %v272 = vmul.f32 %v263, 0.5
    %v273 = vmul.f32 %v264, 0.5
    %v274 = vmul.f32 %v265, 0.5
    %v275 = vmul.f32 %v266, 0.5
    %v276 = vmul.f32 %v267, 0.5
    %v277 = vmul.f32 %v268, 0.5
    %v278 = vmul.f32 %v269, 0.5
    %v279 = vadd.f32 %v234, %v270
    %v280 = vadd.f32 %v235, %v271
    %v281 = vadd.f32 %v236, %v272
    %v282 = vadd.f32 %v237, %v273
    %v283 = vadd.f32 %v238, %v274
    %v284 = vadd.f32 %v239, %v275
    %v285 = vadd.f32 %v240, %v276
    %v286 = vadd.f32 %v241, %v277
    %v287 = vadd.f32 %v242, %v278
    %v288 = vsub.f32 %v279, 0.5
    %v289 = vsub.f32 %v280, 0.5
    %v290 = vsub.f32 %v281, 0.5
    %v291 = vsub.f32 %v282, 0.5
    %v292 = vsub.f32 %v283, 0.5
    %v293 = vsub.f32 %v284, 0.5
    %v294 = vsub.f32 %v285, 0.5
    %v295 = vsub.f32 %v286, 0.5
    %v296 = vsub.f32 %v287, 0.5
    %vm297 = vcmask 31744
    %v298 = vsel %vm297, %v288, 0.0
    %v299 = vsel %vm297, %v289, 0.0
    %v300 = vadd.f32 %v298, %v299
    %v301 = vsel %vm297, %v290, 0.0
    %v302 = vadd.f32 %v300, %v301
    %v303 = vsel %vm297, %v291, 0.0
    %v304 = vadd.f32 %v302, %v303
    %v305 = vsel %vm297, %v292, 0.0
    %v306 = vadd.f32 %v304, %v305
    %v307 = vsel %vm297, %v293, 0.0
    %v308 = vadd.f32 %v306, %v307
    %v309 = vsel %vm297, %v294, 0.0
    %v310 = vadd.f32 %v308, %v309
    %v311 = vsel %vm297, %v295, 0.0
    %v312 = vadd.f32 %v310, %v311
    %v313 = vsel %vm297, %v296, 0.0
    %v314 = vadd.f32 %v312, %v313
    %315 = vadd.xlane.f32.xlu0 %v314
    %v316 = vpop.xlane.xlu0 %315
    %v317 = vrot.slane %v316, 4
    %v318 = vadd.f32 %v316, %v317
    %v319 = vrot.slane %v318, 2
    %v320 = vadd.f32 %v318, %v319
    %v321 = vrot.slane %v320, 1
    %v322 = vadd.f32 %v320, %v321
    %s323 = vtos %v322
    %v324 = vstv %s323
    %v325 = vld [vmem:[%s3] sm:$0xff]
    %v326 = vld [vmem:[%s4] sm:$0xff]
    %v327 = vld [vmem:[%s5] sm:$0xff]
    %v328 = vmax.f32 %v326, 0.0
    %v329 = vand.u32 2147483647, %v326
    %v330 = vsub.f32 0.0, %v329
    %v331 = vmul.f32 %v330, 1.442695
    %v332 = vpow.pop %v331
    %v333 = vadd.f32 %v332, 1.0
    %v334 = vlog2.pop %v333
    %v335 = vmul.f32 %v334, 0.6931472
    %v336 = vmul.f32 -0.5, %v332
    %v337 = vadd.f32 %v336, 1.0
    %v338 = vmul.f32 %v337, %v332
    %v339 = vand.u32 2147483647, %v332
    %vm340 = vcmp.lt.f32.partialorder %v339, 0.0004427343
    %v341 = vsel %vm340, %v338, %v335
    %v342 = vadd.f32 %v328, %v341
    %v343 = vmul.f32 %v342, %v327
    %v344 = vadd.f32 %v325, %v343
    %v345 = vadd.f32 %v342, 1e-15
    %v346 = vlog2.pop %v345
    %v347 = vmul.f32 %v346, 0.6931472
    %v348 = vsub.f32 1.110223e-15, %v347
    %v349 = vmul.f32 %v342, %v342
    %v350 = vmul.f32 %v325, %v325
    %v351 = vadd.f32 %v349, %v350
    %v352 = vmul.f32 %v351, 0.5
    %v353 = vadd.f32 %v348, %v352
    %v354 = vsub.f32 %v353, 0.5
    %vm355 = vcmask 7168
    %v356 = vsel %vm355, %v354, 0.0
    %357 = vadd.xlane.f32.xlu0 %v356
    %v358 = vpop.xlane.xlu0 %357
    %v359 = vrot.slane %v358, 4
    %v360 = vadd.f32 %v358, %v359
    %v361 = vrot.slane %v360, 2
    %v362 = vadd.f32 %v360, %v361
    %v363 = vrot.slane %v362, 1
    %v364 = vadd.f32 %v362, %v363
    %s365 = vtos %v364
    %v366 = vstv %s365
    %367 = vst.msk [vmem:[%s6] sm:$0xff] %vm297, %v198
    %368 = vst.msk [vmem:[%s6 + $0x8] sm:$0xff] %vm297, %v199
    %369 = vst.msk [vmem:[%s6 + $0x10] sm:$0xff] %vm297, %v200
    %370 = vst.msk [vmem:[%s6 + $0x18] sm:$0xff] %vm297, %v201
    %371 = vst.msk [vmem:[%s6 + $0x20] sm:$0xff] %vm297, %v202
    %372 = vst.msk [vmem:[%s6 + $0x28] sm:$0xff] %vm297, %v203
    %373 = vst.msk [vmem:[%s6 + $0x30] sm:$0xff] %vm297, %v204
    %374 = vst.msk [vmem:[%s6 + $0x38] sm:$0xff] %vm297, %v205
    %375 = vst.msk [vmem:[%s6 + $0x40] sm:$0xff] %vm297, %v206
    %376 = vst.msk [vmem:[%s7] sm:$0xff] %vm355, %v344
    %v377 = vadd.f32 %v324, %v366
    %vm378 = vcmask 0
    %379 = vst.msk [vmem:[#allocation2] sm:$0x1] %vm378, %v377
    // Predicated region
    $region26: #{tpu_custom_call.1} parent=1 // pred_check
      _
    $region27: #{tpu_custom_call.1} parent=1 // pred_check_branch
      %381 = sbr.rel (0) target = $region29
    $region28: #{tpu_custom_call.1} parent=1 // pred_region
      _
    $region29: #{tpu_custom_call.1} parent=1 // pred_fallthru
      _
    // Predicated region
    $region30: #{tpu_custom_call.1} parent=1 // pred_check
      _
    $region31: #{tpu_custom_call.1} parent=1 // pred_check_branch
      %383 = sbr.rel (0) target = $region33
    $region32: #{tpu_custom_call.1} parent=1 // pred_region
      _
    $region33: #{tpu_custom_call.1} parent=1 // pred_fallthru
      _
    // Predicated region
    $region34: #{tpu_custom_call.1} parent=1 // pred_check
      _
    $region35: #{tpu_custom_call.1} parent=1 // pred_check_branch
      %385 = sbr.rel (0) target = $region37
    $region36: #{tpu_custom_call.1} parent=1 // pred_region
      %387 = vsyncadd [#allocation3], 0
      %s389 = sshll.u32 [#allocation2], 4
      %s390 = int_to_ptr.vmem [resolvable:$true] %s389
      %s391 = sshll.u32 %s8, 4
      %s392 = int_to_ptr.hbm [resolvable:$true] %s391
      %394 = dma.vmem_to_hbm [thread:$0]  %s390, 16, %s392, [#allocation3]
    $region37: #{tpu_custom_call.1} parent=1 // pred_fallthru
      _
    // Predicated region
    $region38: #{tpu_custom_call.1} parent=1 // pred_check
      _
    $region39: #{tpu_custom_call.1} parent=1 // pred_check_branch
      %396 = sbr.rel (0) target = $region41
    $region40: #{tpu_custom_call.1} parent=1 // pred_region
      _
    $region41: #{tpu_custom_call.1} parent=1 // pred_fallthru
      _
    // Predicated region
    $region42: #{tpu_custom_call.1} parent=1 // pred_check
      _
    $region43: #{tpu_custom_call.1} parent=1 // pred_check_branch
      %398 = sbr.rel (0) target = $region45
    $region44: #{tpu_custom_call.1} parent=1 // pred_region
      _
    $region45: #{tpu_custom_call.1} parent=1 // pred_fallthru
      _
    // Predicated region
    $region46: #{tpu_custom_call.1} parent=1 // pred_check
      _
    $region47: #{tpu_custom_call.1} parent=1 // pred_check_branch
      %400 = sbr.rel (0) target = $region49
    $region48: #{tpu_custom_call.1} parent=1 // pred_region
      %402 = dma.done [#allocation3], 16
    $region49: #{tpu_custom_call.1} parent=1 // pred_fallthru
      _
    %403 = vsyncpa [#allocation3], 1

</llo_original>
